<compile_context>
chip_gen: v7x
topology: tpu7x:2x2x1
jax: 0.10.0
libtpu: 0.0.40
codegen_flags: <defaults>
</compile_context>

<pallas_src>
import jax
import jax.numpy as jnp
from jax.experimental import pallas as pl
from jax.experimental.pallas import tpu as pltpu


def _leaky_relu(x, slope=0.2):
    return jnp.where(x > 0, x, slope * x)


def discriminator_kernel(x_ref, w1_ref, b1_ref, w2_ref, b2_ref, w3_ref, b3_ref,
                         o_ref):
    """One batch tile of the fused MLP forward.

    MXU matmuls accumulate in f32; all elementwise math is f32 (v5e VPU/EUP
    have no bf16 path). Layer 3 (64 -> 1) runs on the VPU + lane reduce so the
    MXU is not burned on an N=1 matmul, and the result is stored lane-dense as
    a (1, batch_tile) row.
    """
    x = x_ref[...]                                             # (T, D) compute dtype

    # Layer 1: (T, D) @ (D, 128) -> f32, + bias, LeakyReLU(0.2)
    h1 = jnp.dot(x, w1_ref[...], preferred_element_type=jnp.float32) + b1_ref[...]
    h1 = _leaky_relu(h1)

    # Layer 2: (T, 128) @ (128, 64) -> f32 (cast lhs to the weight dtype so the
    # MXU runs natively in bf16 when requested; no-op for f32).
    h2 = jnp.dot(h1.astype(w2_ref.dtype), w2_ref[...],
                 preferred_element_type=jnp.float32) + b2_ref[...]
    h2 = _leaky_relu(h2)

    # Layer 3: (T, 64) . (64,) as VPU multiply + XLU lane reduce (no N=1 matmul).
    logits = jnp.sum(h2 * w3_ref[...], axis=-1, keepdims=True) + b3_ref[...]   # (T, 1)
    probs = jax.nn.sigmoid(logits)                                             # (T, 1) f32

    # Lane-dense store: one small XLU transpose of the (T, 1) column -> (1, T).
    o_ref[...] = jnp.transpose(probs).astype(o_ref.dtype)


def _pick_batch_tile(B, D, itemsize):
    """Largest lane-aligned (multiple-of-128) tile dividing B that keeps the
    double-buffered x tile small, preferring >=4 grid steps (>=2 as fallback)
    so the pipeline overlaps DMA with compute and v7x megacore has work."""
    budget = 8 << 20  # bytes for the double-buffered x tile
    cands = [c for c in (4096, 2048, 1024, 512, 256, 128)
             if B % c == 0 and 2 * c * D * itemsize <= budget]
    for min_steps in (4, 2):
        for c in cands:                       # descending: biggest tile first
            if B // c >= min_steps:
                return c
    return B  # tiny batch: single un-tiled step (Pallas overhead dominates here)


def discriminator_forward(x, params, *, batch_tile=None,
                          compute_dtype=jnp.float32):
    """Fused MLP forward. x: (B, D). params: dict of weights/biases.

    compute_dtype: dtype fed to the MXU (x, w1, w2). Use jnp.bfloat16 on
    v6e/v7x to halve HBM traffic and VMEM footprint; accumulation and all
    elementwise math stay float32.
    """
    B, D = x.shape
    cdt = jnp.dtype(compute_dtype)

    if batch_tile is None:
        batch_tile = _pick_batch_tile(B, D, cdt.itemsize)
    if batch_tile != B and (B % batch_tile != 0 or batch_tile % 128 != 0):
        raise ValueError(
            "batch_tile must equal B, or divide B and be a multiple of 128 "
            "(lane-dense output rows)")
    num_tiles = B // batch_tile

    # MXU operands in the compute dtype; VPU/EUP operands stay f32.
    x_c = x.astype(cdt)
    w1 = params["w1"].astype(cdt)                              # (D, 128)
    w2 = params["w2"].astype(cdt)                              # (128, 64)
    b1 = params["b1"].reshape(1, 128).astype(jnp.float32)
    b2 = params["b2"].reshape(1, 64).astype(jnp.float32)
    w3 = params["w3"].reshape(1, 64).astype(jnp.float32)       # row for VPU reduce
    b3 = params["b3"].reshape(1, 1).astype(jnp.float32)

    in_specs = [
        pl.BlockSpec((batch_tile, D), lambda i: (i, 0)),       # x: tiled over batch
        pl.BlockSpec(w1.shape, lambda i: (0, 0)),              # weights: resident
        pl.BlockSpec(b1.shape, lambda i: (0, 0)),
        pl.BlockSpec(w2.shape, lambda i: (0, 0)),
        pl.BlockSpec(b2.shape, lambda i: (0, 0)),
        pl.BlockSpec(w3.shape, lambda i: (0, 0)),
        pl.BlockSpec(b3.shape, lambda i: (0, 0)),
    ]
    # Lane-dense output: one (1, batch_tile) row per grid step along axis 1.
    out_spec = pl.BlockSpec((1, batch_tile), lambda i: (0, i))

    # Advisory cost estimate so XLA schedules this sensibly inside a GAN step.
    flops = 2 * B * (D * 128 + 128 * 64 + 64)
    bytes_accessed = (x_c.size * cdt.itemsize
                      + (w1.size + w2.size) * cdt.itemsize
                      + (b1.size + b2.size + w3.size + b3.size) * 4
                      + B * 4)
    cost = pl.CostEstimate(flops=flops, transcendentals=B,
                           bytes_accessed=bytes_accessed)

    # VMEM budget: double-buffered x/out tiles + resident weights + f32
    # activations, with 2x headroom; capped at 32 MiB (v7x-safe).
    vmem_est = (2 * batch_tile * D * cdt.itemsize               # x (double-buffered)
                + 2 * batch_tile * 4                            # out row (double-buffered)
                + 2 * (w1.size + w2.size) * cdt.itemsize        # weights (buffered)
                + 2 * (b1.size + b2.size + w3.size + b3.size) * 4
                + batch_tile * (128 + 64) * 4)                  # f32 activations
    vmem_limit = int(min(max(2 * vmem_est, 8 << 20), 32 << 20))

    out_row = pl.pallas_call(
        discriminator_kernel,
        out_shape=jax.ShapeDtypeStruct((1, B), jnp.float32),
        grid_spec=pltpu.PrefetchScalarGridSpec(
            num_scalar_prefetch=0,
            grid=(num_tiles,),
            in_specs=in_specs,
            out_specs=out_spec,
        ),
        compiler_params=pltpu.CompilerParams(
            dimension_semantics=("parallel",),
            vmem_limit_bytes=vmem_limit),
        cost_estimate=cost,
    )(x_c, w1, b1, w2, b2, w3, b3)

    # (1, B) lane-dense row back to the module's (B, 1) column.
    return out_row.reshape(B, 1)


def init_params(key, input_dim):
    """Deterministic synthetic parameters (shapes per the PyTorch module)."""
    k1, k2, k3, k4, k5, k6 = jax.random.split(key, 6)
    scale1 = 1.0 / jnp.sqrt(input_dim)
    scale2 = 1.0 / jnp.sqrt(128.0)
    scale3 = 1.0 / jnp.sqrt(64.0)
    return {
        "w1": jax.random.uniform(k1, (input_dim, 128), jnp.float32,
                                 -scale1, scale1),
        "b1": jax.random.uniform(k2, (1, 128), jnp.float32, -scale1, scale1),
        "w2": jax.random.uniform(k3, (128, 64), jnp.float32, -scale2, scale2),
        "b2": jax.random.uniform(k4, (1, 64), jnp.float32, -scale2, scale2),
        "w3": jax.random.uniform(k5, (64, 1), jnp.float32, -scale3, scale3),
        "b3": jax.random.uniform(k6, (1, 1), jnp.float32, -scale3, scale3),
    }


def discriminator_ref(x, params):
    """Pure-JAX reference for correctness checking."""
    h = x @ params["w1"] + params["b1"]
    h = jnp.where(h > 0, h, 0.2 * h)
    h = h @ params["w2"] + params["b2"]
    h = jnp.where(h > 0, h, 0.2 * h)
    h = h @ params["w3"] + params["b3"]
    return jax.nn.sigmoid(h)


if __name__ == "__main__":
    key = jax.random.PRNGKey(0)
    k_params, k_x = jax.random.split(key)

    # Small but large enough to exercise batch tiling: B=512, D=32 ->
    # batch_tile=128, grid=(4,) so the pipeline and (v7x) megacore are active.
    # Note: at toy batches (e.g. B=8) pallas_call launch overhead dominates and
    # plain XLA would be preferable; the kernel still runs correctly there.
    B, D = 512, 32
    params = init_params(k_params, D)
    x = jax.random.normal(k_x, (B, D), jnp.float32)

    ref = discriminator_ref(x, params)

    # f32 path (tolerance loose enough to absorb matmul-precision differences
    # between the XLA reference dot and the in-kernel MXU dot).
    out = jax.block_until_ready(discriminator_forward(x, params))
    assert out.shape == (B, 1)
    assert jnp.allclose(out, ref, atol=2e-3, rtol=2e-3), "f32 mismatch vs reference"

    # bf16 MXU path (v6e/v7x HBM + VMEM saver); f32 accumulation keeps the
    # sigmoid outputs within a few 1e-3 of the f32 reference.
    out_bf16 = jax.block_until_ready(
        discriminator_forward(x, params, compute_dtype=jnp.bfloat16))
    assert out_bf16.shape == (B, 1)
    assert jnp.allclose(out_bf16, ref, atol=3e-2), "bf16 mismatch vs reference"

    print("KERNEL_OK")
</pallas_src>

<mosaic_0001>
module attributes {stable_mosaic.version = 11 : i64} {
  func.func @discriminator_kernel(%arg0: i32, %arg1: memref<128x32xf32, #tpu.memory_space<vmem>>, %arg2: memref<32x128xf32, #tpu.memory_space<vmem>>, %arg3: memref<1x128xf32, #tpu.memory_space<vmem>>, %arg4: memref<128x64xf32, #tpu.memory_space<vmem>>, %arg5: memref<1x64xf32, #tpu.memory_space<vmem>>, %arg6: memref<1x64xf32, #tpu.memory_space<vmem>>, %arg7: memref<1x1xf32, #tpu.memory_space<vmem>>, %arg8: memref<1x128xf32, #tpu.memory_space<vmem>>) attributes {dimension_semantics = [#tpu.dimension_semantics<parallel>], iteration_bounds = array<i64: 4>, scalar_prefetch = 0 : i64, scratch_operands = 0 : i64, tpu.core_type = #tpu.core_type<tc>, window_params = [{transform_indices = @transform_0, window_bounds = array<i64: 128, 32>}, {pipeline_mode = #tpu.pipeline_mode<synchronous>, transform_indices = @transform_1, window_bounds = array<i64: 32, 128>}, {pipeline_mode = #tpu.pipeline_mode<synchronous>, transform_indices = @transform_2, window_bounds = array<i64: 1, 128>}, {pipeline_mode = #tpu.pipeline_mode<synchronous>, transform_indices = @transform_3, window_bounds = array<i64: 128, 64>}, {pipeline_mode = #tpu.pipeline_mode<synchronous>, transform_indices = @transform_4, window_bounds = array<i64: 1, 64>}, {pipeline_mode = #tpu.pipeline_mode<synchronous>, transform_indices = @transform_5, window_bounds = array<i64: 1, 64>}, {pipeline_mode = #tpu.pipeline_mode<synchronous>, transform_indices = @transform_6, window_bounds = array<i64: 1, 1>}, {transform_indices = @transform_7, window_bounds = array<i64: 1, 128>}]} {
    %c0 = arith.constant 0 : index
    %c0_0 = arith.constant 0 : index
    %0 = vector.load %arg1[%c0, %c0_0] : memref<128x32xf32, #tpu.memory_space<vmem>>, vector<128x32xf32>
    %c0_1 = arith.constant 0 : index
    %c0_2 = arith.constant 0 : index
    %1 = vector.load %arg2[%c0_1, %c0_2] : memref<32x128xf32, #tpu.memory_space<vmem>>, vector<32x128xf32>
    %cst = arith.constant dense<0.000000e+00> : vector<128x128xf32>
    %2 = tpu.matmul %0, %1, %cst {dimension_numbers = #tpu.dot_dimension_numbers<[1], [0], [0], [1], [0, 0, 1, 1], [], []>} : vector<128x32xf32>, vector<32x128xf32>, vector<128x128xf32> -> vector<128x128xf32>
    %c0_3 = arith.constant 0 : index
    %c0_4 = arith.constant 0 : index
    %3 = vector.load %arg3[%c0_3, %c0_4] : memref<1x128xf32, #tpu.memory_space<vmem>>, vector<1x128xf32>
    %4 = vector.broadcast %3 : vector<1x128xf32> to vector<128x128xf32>
    %5 = arith.addf %2, %4 : vector<128x128xf32>
    %cst_5 = arith.constant 0.000000e+00 : f32
    %6 = vector.broadcast %cst_5 : f32 to vector<128x128xf32>
    %7 = arith.cmpf ogt, %5, %6 : vector<128x128xf32>
    %cst_6 = arith.constant 2.000000e-01 : f32
    %8 = vector.broadcast %cst_6 : f32 to vector<128x128xf32>
    %9 = arith.mulf %8, %5 : vector<128x128xf32>
    %10 = arith.select %7, %5, %9 : vector<128x128xi1>, vector<128x128xf32>
    %c0_7 = arith.constant 0 : index
    %c0_8 = arith.constant 0 : index
    %11 = vector.load %arg4[%c0_7, %c0_8] : memref<128x64xf32, #tpu.memory_space<vmem>>, vector<128x64xf32>
    %cst_9 = arith.constant dense<0.000000e+00> : vector<128x64xf32>
    %12 = tpu.matmul %10, %11, %cst_9 {dimension_numbers = #tpu.dot_dimension_numbers<[1], [0], [0], [1], [0, 0, 1, 1], [], []>} : vector<128x128xf32>, vector<128x64xf32>, vector<128x64xf32> -> vector<128x64xf32>
    %c0_10 = arith.constant 0 : index
    %c0_11 = arith.constant 0 : index
    %13 = vector.load %arg5[%c0_10, %c0_11] : memref<1x64xf32, #tpu.memory_space<vmem>>, vector<1x64xf32>
    %14 = vector.broadcast %13 : vector<1x64xf32> to vector<128x64xf32>
    %15 = arith.addf %12, %14 : vector<128x64xf32>
    %cst_12 = arith.constant 0.000000e+00 : f32
    %16 = vector.broadcast %cst_12 : f32 to vector<128x64xf32>
    %17 = arith.cmpf ogt, %15, %16 : vector<128x64xf32>
    %cst_13 = arith.constant 2.000000e-01 : f32
    %18 = vector.broadcast %cst_13 : f32 to vector<128x64xf32>
    %19 = arith.mulf %18, %15 : vector<128x64xf32>
    %20 = arith.select %17, %15, %19 : vector<128x64xi1>, vector<128x64xf32>
    %c0_14 = arith.constant 0 : index
    %c0_15 = arith.constant 0 : index
    %21 = vector.load %arg6[%c0_14, %c0_15] : memref<1x64xf32, #tpu.memory_space<vmem>>, vector<1x64xf32>
    %22 = vector.broadcast %21 : vector<1x64xf32> to vector<128x64xf32>
    %23 = arith.mulf %20, %22 : vector<128x64xf32>
    %cst_16 = arith.constant dense<0.000000e+00> : vector<128xf32>
    %24 = vector.multi_reduction <add>, %23, %cst_16 [1] : vector<128x64xf32> to vector<128xf32>
    %25 = vector.shape_cast %24 : vector<128xf32> to vector<128x1xf32>
    %c0_17 = arith.constant 0 : index
    %c0_18 = arith.constant 0 : index
    %26 = vector.load %arg7[%c0_17, %c0_18] : memref<1x1xf32, #tpu.memory_space<vmem>>, vector<1x1xf32>
    %27 = vector.broadcast %26 : vector<1x1xf32> to vector<128x1xf32>
    %28 = arith.addf %25, %27 : vector<128x1xf32>
    %29 = arith.negf %28 : vector<128x1xf32>
    %30 = math.exp %29 : vector<128x1xf32>
    %cst_19 = arith.constant 1.000000e+00 : f32
    %31 = vector.broadcast %cst_19 : f32 to vector<128x1xf32>
    %32 = arith.addf %31, %30 : vector<128x1xf32>
    %33 = arith.divf %31, %32 : vector<128x1xf32>
    %34 = tpu.transpose %33, [1, 0] : vector<128x1xf32> -> vector<1x128xf32>
    %c0_20 = arith.constant 0 : index
    %c0_21 = arith.constant 0 : index
    %35 = vector.load %arg8[%c0_20, %c0_21] : memref<1x128xf32, #tpu.memory_space<vmem>>, vector<1x128xf32>
    tpu.vector_store %arg8[%c0_20, %c0_21], %34 {strides = array<i32>} : memref<1x128xf32, #tpu.memory_space<vmem>>, vector<1x128xf32>,
    return
  }
  func.func @transform_0(%arg0: i32) -> (i32, i32) {
    %c0_i32 = arith.constant 0 : i32
    %c0_i32_0 = arith.constant 0 : i32
    return %arg0, %c0_i32 : i32, i32
  }
  func.func @transform_1(%arg0: i32) -> (i32, i32) {
    %c0_i32 = arith.constant 0 : i32
    %c0_i32_0 = arith.constant 0 : i32
    %c0_i32_1 = arith.constant 0 : i32
    return %c0_i32, %c0_i32_0 : i32, i32
  }
  func.func @transform_2(%arg0: i32) -> (i32, i32) {
    %c0_i32 = arith.constant 0 : i32
    %c0_i32_0 = arith.constant 0 : i32
    %c0_i32_1 = arith.constant 0 : i32
    return %c0_i32, %c0_i32_0 : i32, i32
  }
  func.func @transform_3(%arg0: i32) -> (i32, i32) {
    %c0_i32 = arith.constant 0 : i32
    %c0_i32_0 = arith.constant 0 : i32
    %c0_i32_1 = arith.constant 0 : i32
    return %c0_i32, %c0_i32_0 : i32, i32
  }
  func.func @transform_4(%arg0: i32) -> (i32, i32) {
    %c0_i32 = arith.constant 0 : i32
    %c0_i32_0 = arith.constant 0 : i32
    %c0_i32_1 = arith.constant 0 : i32
    return %c0_i32, %c0_i32_0 : i32, i32
  }
  func.func @transform_5(%arg0: i32) -> (i32, i32) {
    %c0_i32 = arith.constant 0 : i32
    %c0_i32_0 = arith.constant 0 : i32
    %c0_i32_1 = arith.constant 0 : i32
    return %c0_i32, %c0_i32_0 : i32, i32
  }
  func.func @transform_6(%arg0: i32) -> (i32, i32) {
    %c0_i32 = arith.constant 0 : i32
    %c0_i32_0 = arith.constant 0 : i32
    %c0_i32_1 = arith.constant 0 : i32
    return %c0_i32, %c0_i32_0 : i32, i32
  }
  func.func @transform_7(%arg0: i32) -> (i32, i32) {
    %c0_i32 = arith.constant 0 : i32
    %c0_i32_0 = arith.constant 0 : i32
    return %c0_i32, %arg0 : i32, i32
  }
}

</mosaic_0001>

<llo_original>
// kernel: tpu_custom_call.1
$region0: #{tpu_custom_call.1}
  #allocation0 [shape = 'u32[]', space=smem, size = 0x4, offset = 0x4, fixed_abs, tag = 'smem constant byte address 0x4 - core index']
  #allocation1 [shape = 'u32[144,128]{1,0:T(1,128)}', space=vmem, size = 0x12000, scoped, tag = 'internal scratch']
  #allocation2 [shape = 'f32[1,1]{1,0:T(1,128)S(1)}', space=vmem, size = 0x200, scoped, tag = 'scoped memory for tpu_custom_call.1']
  %s0 = inlined_call_operand.vmem [shape: f32[512,32], index: 0, kind: input, shape index: {}]
  %s1 = inlined_call_operand.vmem [shape: f32[32,128], index: 1, kind: input, shape index: {}]
  %s2 = inlined_call_operand.vmem [shape: f32[1,128], index: 2, kind: input, shape index: {}]
  %s3 = inlined_call_operand.vmem [shape: f32[128,64], index: 3, kind: input, shape index: {}]
  %s4 = inlined_call_operand.vmem [shape: f32[1,64], index: 4, kind: input, shape index: {}]
  %s5 = inlined_call_operand.vmem [shape: f32[1,64], index: 5, kind: input, shape index: {}]
  %s6 = inlined_call_operand.<no memory space> [shape: f32[1,1], index: 6, kind: input, shape index: {}]
  %s7 = inlined_call_operand.hbm [shape: f32[1,512], index: 7, kind: output, shape index: {}]
  %s8 = sld [smem:[#allocation0]]
  $region61: #{tpu_custom_call.1} parent=0
    _
  %s10 = ssub.s32 1, %s8
  %s11 = scalar_select 0, %s10, %s8
  %v12 = vstv %s6
  %13 = vst [vmem:[#allocation2] sm:$0x1] %v12
  $region1: #{tpu_custom_call.1} parent=0
    #allocation3 [shape = 'u8[1024]{0}', space=vmem, size = 0x400, scoped, tag = 'output window, operand 0']
    #allocation4 [shape = 's32[2]{0}', space=sflag, size = 0x8, scoped, tag = 'scoped memory for tpu_custom_call.1']
    %14 = vsyncpa [#allocation4], 0
    %s15 = scalar_lea.sflag [#allocation4], 1
    %16 = vsyncpa %s15, 0
    loop: start=0, step=1, limit=6
    $region2: #{tpu_custom_call.1} parent=1 // loop_pre_header
      _
    $region3: #{tpu_custom_call.1} parent=1 // loop_header
      %s18 = sphi 0, %s22
      %p19 = scmp.ge.s32.totalorder %s18, 6
      %s28 = sphi 0, %s30
      %s31 = sphi 0, %s28
      %s32 = sphi 0, %s31
      %s48 = sphi 0, %s32
      %s52 = sphi 0, %s52
      %s54 = sphi 0, %s52
      %s55 = sphi 0, %s54
      %s69 = sphi 0, %s55
      %s73 = sphi 0, %s73
      %s75 = sphi 0, %s73
      %s76 = sphi 0, %s75
      %s90 = sphi 0, %s76
      %s94 = sphi 0, %s94
      %s96 = sphi 0, %s94
      %s97 = sphi 0, %s96
      %s111 = sphi 0, %s97
      %s115 = sphi 0, %s115
      %s117 = sphi 0, %s115
      %s118 = sphi 0, %s117
      %s132 = sphi 0, %s118
      %s136 = sphi 0, %s136
      %s138 = sphi 0, %s136
      %s139 = sphi 0, %s138
      %s153 = sphi 0, %s139
      %s157 = sphi 0, %s157
      %s159 = sphi 0, %s157
      %s160 = sphi 0, %s159
      %s174 = sphi 0, %s160
      %s180 = sphi 0, %s182
      %s183 = sphi 0, %s180
      %s184 = sphi 0, %s183
      %s200 = sphi 0, %s184
    $region4: #{tpu_custom_call.1} parent=1 // loop_header_branch
      %21 = sbr.rel (%p19) target = $region8
    $region5: #{tpu_custom_call.1} parent=1 // loop_body
      %s23 = ssub.s32 %s18, 1
      %s24 = ssub.s32 %s18, 2
      %s25 = sadd.s32 %s18, 1
      %s26 = ssub.s32 %s18, %s25
      %p27 = scmp.eq.s32.totalorder %s26, 0
      %s29 = sadd.s32 %s28, 1
      %s30 = scalar_select %p27, %s28, %s29
      %p33 = pneg %p27
      %p34 = scmp.eq.s32.totalorder %s18, 3
      %p35 = por %p33, %p34
      %p36 = scmp.ne.s32.totalorder %s28, %s31
      %p37 = scmp.eq.s32.totalorder %s18, 0
      %p38 = por %p36, %p37
      %p39 = scmp.ne.s32.totalorder %s28, %s31
      %p40 = scmp.eq.s32.totalorder %s23, 3
      %p41 = por %p39, %p40
      %p42 = scmp.ne.s32.totalorder %s31, %s32
      %p43 = scmp.eq.s32.totalorder %s23, 0
      %p44 = por %p42, %p43
      %p45 = scmp.ne.s32.totalorder %s31, %s32
      %p46 = scmp.eq.s32.totalorder %s24, 3
      %p47 = por %p45, %p46
      %p49 = scmp.ne.s32.totalorder %s32, %s48
      %p50 = scmp.eq.s32.totalorder %s24, 0
      %p51 = por %p49, %p50
      %s53 = sadd.s32 %s52, 1
      %p56 = scmp.eq.s32.totalorder %s18, 3
      %p57 = scmp.ne.s32.totalorder %s52, %s54
      %p58 = scmp.eq.s32.totalorder %s18, 0
      %p59 = por %p57, %p58
      %p60 = scmp.ne.s32.totalorder %s52, %s54
      %p61 = scmp.eq.s32.totalorder %s23, 3
      %p62 = por %p60, %p61
      %p63 = scmp.ne.s32.totalorder %s54, %s55
      %p64 = scmp.eq.s32.totalorder %s23, 0
      %p65 = por %p63, %p64
      %p66 = scmp.ne.s32.totalorder %s54, %s55
      %p67 = scmp.eq.s32.totalorder %s24, 3
      %p68 = por %p66, %p67
      %p70 = scmp.ne.s32.totalorder %s55, %s69
      %p71 = scmp.eq.s32.totalorder %s24, 0
      %p72 = por %p70, %p71
      %s74 = sadd.s32 %s73, 1
      %p77 = scmp.eq.s32.totalorder %s18, 3
      %p78 = scmp.ne.s32.totalorder %s73, %s75
      %p79 = scmp.eq.s32.totalorder %s18, 0
      %p80 = por %p78, %p79
      %p81 = scmp.ne.s32.totalorder %s73, %s75
      %p82 = scmp.eq.s32.totalorder %s23, 3
      %p83 = por %p81, %p82
      %p84 = scmp.ne.s32.totalorder %s75, %s76
      %p85 = scmp.eq.s32.totalorder %s23, 0
      %p86 = por %p84, %p85
      %p87 = scmp.ne.s32.totalorder %s75, %s76
      %p88 = scmp.eq.s32.totalorder %s24, 3
      %p89 = por %p87, %p88
      %p91 = scmp.ne.s32.totalorder %s76, %s90
      %p92 = scmp.eq.s32.totalorder %s24, 0
      %p93 = por %p91, %p92
      %s95 = sadd.s32 %s94, 1
      %p98 = scmp.eq.s32.totalorder %s18, 3
      %p99 = scmp.ne.s32.totalorder %s94, %s96
      %p100 = scmp.eq.s32.totalorder %s18, 0
      %p101 = por %p99, %p100
      %p102 = scmp.ne.s32.totalorder %s94, %s96
      %p103 = scmp.eq.s32.totalorder %s23, 3
      %p104 = por %p102, %p103
      %p105 = scmp.ne.s32.totalorder %s96, %s97
      %p106 = scmp.eq.s32.totalorder %s23, 0
      %p107 = por %p105, %p106
      %p108 = scmp.ne.s32.totalorder %s96, %s97
      %p109 = scmp.eq.s32.totalorder %s24, 3
      %p110 = por %p108, %p109
      %p112 = scmp.ne.s32.totalorder %s97, %s111
      %p113 = scmp.eq.s32.totalorder %s24, 0
      %p114 = por %p112, %p113
      %s116 = sadd.s32 %s115, 1
      %p119 = scmp.eq.s32.totalorder %s18, 3
      %p120 = scmp.ne.s32.totalorder %s115, %s117
      %p121 = scmp.eq.s32.totalorder %s18, 0
      %p122 = por %p120, %p121
      %p123 = scmp.ne.s32.totalorder %s115, %s117
      %p124 = scmp.eq.s32.totalorder %s23, 3
      %p125 = por %p123, %p124
      %p126 = scmp.ne.s32.totalorder %s117, %s118
      %p127 = scmp.eq.s32.totalorder %s23, 0
      %p128 = por %p126, %p127
      %p129 = scmp.ne.s32.totalorder %s117, %s118
      %p130 = scmp.eq.s32.totalorder %s24, 3
      %p131 = por %p129, %p130
      %p133 = scmp.ne.s32.totalorder %s118, %s132
      %p134 = scmp.eq.s32.totalorder %s24, 0
      %p135 = por %p133, %p134
      %s137 = sadd.s32 %s136, 1
      %p140 = scmp.eq.s32.totalorder %s18, 3
      %p141 = scmp.ne.s32.totalorder %s136, %s138
      %p142 = scmp.eq.s32.totalorder %s18, 0
      %p143 = por %p141, %p142
      %p144 = scmp.ne.s32.totalorder %s136, %s138
      %p145 = scmp.eq.s32.totalorder %s23, 3
      %p146 = por %p144, %p145
      %p147 = scmp.ne.s32.totalorder %s138, %s139
      %p148 = scmp.eq.s32.totalorder %s23, 0
      %p149 = por %p147, %p148
      %p150 = scmp.ne.s32.totalorder %s138, %s139
      %p151 = scmp.eq.s32.totalorder %s24, 3
      %p152 = por %p150, %p151
      %p154 = scmp.ne.s32.totalorder %s139, %s153
      %p155 = scmp.eq.s32.totalorder %s24, 0
      %p156 = por %p154, %p155
      %s158 = sadd.s32 %s157, 1
      %p161 = scmp.eq.s32.totalorder %s18, 3
      %p162 = scmp.ne.s32.totalorder %s157, %s159
      %p163 = scmp.eq.s32.totalorder %s18, 0
      %p164 = por %p162, %p163
      %p165 = scmp.ne.s32.totalorder %s157, %s159
      %p166 = scmp.eq.s32.totalorder %s23, 3
      %p167 = por %p165, %p166
      %p168 = scmp.ne.s32.totalorder %s159, %s160
      %p169 = scmp.eq.s32.totalorder %s23, 0
      %p170 = por %p168, %p169
      %p171 = scmp.ne.s32.totalorder %s159, %s160
      %p172 = scmp.eq.s32.totalorder %s24, 3
      %p173 = por %p171, %p172
      %p175 = scmp.ne.s32.totalorder %s160, %s174
      %p176 = scmp.eq.s32.totalorder %s24, 0
      %p177 = por %p175, %p176
      %s178 = ssub.s32 %s18, %s25
      %p179 = scmp.eq.s32.totalorder %s178, 0
      %s181 = sadd.s32 %s180, 1
      %s182 = scalar_select %p179, %s180, %s181
      %p185 = pneg %p179
      %p186 = scmp.eq.s32.totalorder %s18, 3
      %p187 = por %p185, %p186
      %p188 = scmp.ne.s32.totalorder %s180, %s183
      %p189 = scmp.eq.s32.totalorder %s18, 0
      %p190 = por %p188, %p189
      %p191 = scmp.ne.s32.totalorder %s180, %s183
      %p192 = scmp.eq.s32.totalorder %s23, 3
      %p193 = por %p191, %p192
      %p194 = scmp.ne.s32.totalorder %s183, %s184
      %p195 = scmp.eq.s32.totalorder %s23, 0
      %p196 = por %p194, %p195
      %p197 = scmp.ne.s32.totalorder %s183, %s184
      %p198 = scmp.eq.s32.totalorder %s24, 3
      %p199 = por %p197, %p198
      %p201 = scmp.ne.s32.totalorder %s184, %s200
      %p202 = scmp.eq.s32.totalorder %s24, 0
      %p203 = por %p201, %p202
      %p204 = scmp.le.s32.totalorder 1, %s18
      %p205 = scmp.lt.s32.totalorder %s18, 5
      %p206 = pnand %p204, %p205
      %p207 = pneg %p206
      // Predicated region
      $region9: #{tpu_custom_call.1} parent=5 // pred_check
        _
      $region10: #{tpu_custom_call.1} parent=5 // pred_check_branch
        %209 = sbr.rel (%p206) target = $region12
      $region11: #{tpu_custom_call.1} parent=5 // pred_region
        %s210 = ssub.s32 %s18, 1
        // Predicated region
        $region13: #{tpu_custom_call.1} parent=11 // pred_check
          %p211 = pneg %p65
        $region14: #{tpu_custom_call.1} parent=11 // pred_check_branch
          %213 = sbr.rel (%p211) target = $region16
        $region15: #{tpu_custom_call.1} parent=11 // pred_region
          _
        $region16: #{tpu_custom_call.1} parent=11 // pred_fallthru
          _
        // Predicated region
        $region17: #{tpu_custom_call.1} parent=11 // pred_check
          %p214 = pneg %p86
        $region18: #{tpu_custom_call.1} parent=11 // pred_check_branch
          %216 = sbr.rel (%p214) target = $region20
        $region19: #{tpu_custom_call.1} parent=11 // pred_region
          _
        $region20: #{tpu_custom_call.1} parent=11 // pred_fallthru
          _
        // Predicated region
        $region21: #{tpu_custom_call.1} parent=11 // pred_check
          %p217 = pneg %p107
        $region22: #{tpu_custom_call.1} parent=11 // pred_check_branch
          %219 = sbr.rel (%p217) target = $region24
        $region23: #{tpu_custom_call.1} parent=11 // pred_region
          _
        $region24: #{tpu_custom_call.1} parent=11 // pred_fallthru
          _
        // Predicated region
        $region25: #{tpu_custom_call.1} parent=11 // pred_check
          %p220 = pneg %p128
        $region26: #{tpu_custom_call.1} parent=11 // pred_check_branch
          %222 = sbr.rel (%p220) target = $region28
        $region27: #{tpu_custom_call.1} parent=11 // pred_region
          _
        $region28: #{tpu_custom_call.1} parent=11 // pred_fallthru
          _
        // Predicated region
        $region29: #{tpu_custom_call.1} parent=11 // pred_check
          %p223 = pneg %p149
        $region30: #{tpu_custom_call.1} parent=11 // pred_check_branch
          %225 = sbr.rel (%p223) target = $region32
        $region31: #{tpu_custom_call.1} parent=11 // pred_region
          _
        $region32: #{tpu_custom_call.1} parent=11 // pred_fallthru
          _
        // Predicated region
        $region33: #{tpu_custom_call.1} parent=11 // pred_check
          %p226 = pneg %p170
        $region34: #{tpu_custom_call.1} parent=11 // pred_check_branch
          %228 = sbr.rel (%p226) target = $region36
        $region35: #{tpu_custom_call.1} parent=11 // pred_region
          _
        $region36: #{tpu_custom_call.1} parent=11 // pred_fallthru
          _
      $region12: #{tpu_custom_call.1} parent=5 // pred_fallthru
        _
      %p229 = scmp.lt.s32.totalorder %s18, 4
      // Predicated region
      $region37: #{tpu_custom_call.1} parent=5 // pred_check
        %p230 = pneg %p229
      $region38: #{tpu_custom_call.1} parent=5 // pred_check_branch
        %232 = sbr.rel (%p230) target = $region40
      $region39: #{tpu_custom_call.1} parent=5 // pred_region
        // Predicated region
        $region41: #{tpu_custom_call.1} parent=39 // pred_check
          %p233 = pneg %p38
        $region42: #{tpu_custom_call.1} parent=39 // pred_check_branch
          %235 = sbr.rel (%p233) target = $region44
        $region43: #{tpu_custom_call.1} parent=39 // pred_region
          %s236 = smul.u32 16, %s18
          %p237 = scmp.lt.s32.totalorder %s236, 63
          %s238 = scalar_select %p237, %s236, 63
          %s239 = smul.addr %s238, 8
          %s240 = scalar_lea.vmem %s0, %s239
          %s241 = smul.u32 16, %s18
        $region44: #{tpu_custom_call.1} parent=39 // pred_fallthru
          _
      $region40: #{tpu_custom_call.1} parent=5 // pred_fallthru
        _
      %p242 = scmp.le.s32.totalorder 1, %s18
      %p243 = scmp.lt.s32.totalorder %s18, 5
      %p244 = pnand %p242, %p243
      %p245 = pneg %p244
      // Predicated region
      $region45: #{tpu_custom_call.1} parent=5 // pred_check
        _
      $region46: #{tpu_custom_call.1} parent=5 // pred_check_branch
        %247 = sbr.rel (%p244) target = $region48
      $region47: #{tpu_custom_call.1} parent=5 // pred_region
        %s248 = ssub.s32 %s18, 1
        %s249 = smul.u32 16, %s23
        %p250 = scmp.lt.s32.totalorder %s249, 63
        %s251 = scalar_select %p250, %s249, 63
        %s252 = smul.addr %s251, 8
        %s253 = scalar_lea.vmem %s0, %s252
        %p254 = pneg %p44
        %p255 = pneg %p41
        %p256 = pneg %p65
        %p257 = pneg %p62
        %p258 = pneg %p86
        %p259 = pneg %p83
        %p260 = pneg %p107
        %p261 = pneg %p104
        %p262 = pneg %p128
        %p263 = pneg %p125
        %p264 = pneg %p149
        %p265 = pneg %p146
        %p266 = pneg %p170
        %p267 = pneg %p167
        %p268 = pneg %p196
        %p269 = pneg %p193
        %s270 = sand.u32 %s183, 1
        %s271 = scalar_lea.sflag [#allocation4], %s270
        %s272 = sand.u32 %s183, 1
        %s273 = scalar_lea.vmem [#allocation3], %s272
        %s274 = smul.u32 16, %s23
        %p275 = scmp.lt.s32.totalorder %s274, 63
        %s276 = scalar_select %p275, %s274, 63
        %s277 = smul.addr %s276, 8
        %s278 = scalar_lea.vmem %s0, %s277
        %s279 = smul.u32 16, %s23
        %v280 = vld [vmem:[%s278] sm:$0xff]
        %v281 = vld [vmem:[%s278 + $0x8] sm:$0xff]
        %v282 = vld [vmem:[%s278 + $0x10] sm:$0xff]
        %v283 = vld [vmem:[%s278 + $0x18] sm:$0xff]
        %v284 = vld [vmem:[%s278 + $0x20] sm:$0xff]
        %v285 = vld [vmem:[%s278 + $0x28] sm:$0xff]
        %v286 = vld [vmem:[%s278 + $0x30] sm:$0xff]
        %v287 = vld [vmem:[%s278 + $0x38] sm:$0xff]
        %v288 = vld [vmem:[%s278 + $0x40] sm:$0xff]
        %v289 = vld [vmem:[%s278 + $0x48] sm:$0xff]
        %v290 = vld [vmem:[%s278 + $0x50] sm:$0xff]
        %v291 = vld [vmem:[%s278 + $0x58] sm:$0xff]
        %v292 = vld [vmem:[%s278 + $0x60] sm:$0xff]
        %v293 = vld [vmem:[%s278 + $0x68] sm:$0xff]
        %v294 = vld [vmem:[%s278 + $0x70] sm:$0xff]
        %v295 = vld [vmem:[%s278 + $0x78] sm:$0xff]
        %v296 = vld [vmem:[%s1] sm:$0xff]
        %v297 = vld [vmem:[%s1 + $0x8] sm:$0xff]
        %v298 = vld [vmem:[%s1 + $0x10] sm:$0xff]
        %v299 = vld [vmem:[%s1 + $0x18] sm:$0xff]
        %v300 = vld [vmem:[%s2] sm:$0x1]
        %v302 = vlaneseq
        %v303 = vshrl.u32 %v302, 7
        %v304 = vsub.s32 0, %v303
        %v305 = vrot.slane %v300, %v304
        %vm307 = vcmask 261120
        %v309 = vsel %vm307, %v280, 0
        %v312 = vsel %vm307, %v281, 0
        %v315 = vsel %vm307, %v282, 0
        %v318 = vsel %vm307, %v283, 0
        %v321 = vsel %vm307, %v284, 0
        %v324 = vsel %vm307, %v285, 0
        %v327 = vsel %vm307, %v286, 0
        %v330 = vsel %vm307, %v287, 0
        %v333 = vsel %vm307, %v288, 0
        %v336 = vsel %vm307, %v289, 0
        %v339 = vsel %vm307, %v290, 0
        %v342 = vsel %vm307, %v291, 0
        %v345 = vsel %vm307, %v292, 0
        %v348 = vsel %vm307, %v293, 0
        %v351 = vsel %vm307, %v294, 0
        %v354 = vsel %vm307, %v295, 0
        %356 = vmatprep.subr.mxu0 0.0
        %357 = vmatpush1.msra.mxu0 %v296
        %358 = vmatprep.subr.mxu0 0.0
        %359 = vmatpush1.msra.mxu0 %v297
        %360 = vmatprep.subr.mxu0 0.0
        %361 = vmatpush1.msra.mxu0 %v298
        %362 = vmatprep.subr.mxu0 0.0
        %363 = vmatpush1.msra.mxu0 %v299
        %364 = vmatprep.subr.mxu0 0.0
        %365 = vmatpush1.msra.mxu0 0.0
        %366 = vmatprep.subr.mxu0 0.0
        %367 = vmatpush1.msra.mxu0 0.0
        %368 = vmatprep.subr.mxu0 0.0
        %369 = vmatpush1.msra.mxu0 0.0
        %370 = vmatprep.subr.mxu0 0.0
        %371 = vmatpush1.msra.mxu0 0.0
        %372 = vmatprep.subr.mxu0 0.0
        %373 = vmatpush1.msra.mxu0 0.0
        %374 = vmatprep.subr.mxu0 0.0
        %375 = vmatpush1.msra.mxu0 0.0
        %376 = vmatprep.subr.mxu0 0.0
        %377 = vmatpush1.msra.mxu0 0.0
        %378 = vmatprep.subr.mxu0 0.0
        %379 = vmatpush1.msra.mxu0 0.0
        %380 = vmatprep.subr.mxu0 0.0
        %381 = vmatpush1.msra.mxu0 0.0
        %382 = vmatprep.subr.mxu0 0.0
        %383 = vmatpush1.msra.mxu0 0.0
        %384 = vmatprep.subr.mxu0 0.0
        %385 = vmatpush1.msra.mxu0 0.0
        %386 = vmatprep.subr.mxu0 0.0
        %387 = vmatpush1.msra.mxu0 0.0
        %388 = vmatprep.subr.mxu0 0.0
        %389 = vmatpush1.msra.mxu0 0.0
        %390 = vmatprep.subr.mxu0 0.0
        %391 = vmatpush1.msra.mxu0 0.0
        %392 = vmatprep.subr.mxu0 0.0
        %393 = vmatpush1.msra.mxu0 0.0
        %394 = vmatprep.subr.mxu0 0.0
        %395 = vmatpush1.msra.mxu0 0.0
        %396 = vmatprep.subr.mxu0 0.0
        %397 = vmatpush1.msra.mxu0 0.0
        %398 = vmatprep.subr.mxu0 0.0
        %399 = vmatpush1.msra.mxu0 0.0
        %400 = vmatprep.subr.mxu0 0.0
        %401 = vmatpush1.msra.mxu0 0.0
        %402 = vmatprep.subr.mxu0 0.0
        %403 = vmatpush1.msra.mxu0 0.0
        %404 = vmatprep.subr.mxu0 0.0
        %405 = vmatpush1.msra.mxu0 0.0
        %406 = vmatprep.subr.mxu0 0.0
        %407 = vmatpush1.msra.mxu0 0.0
        %408 = vmatprep.subr.mxu0 0.0
        %409 = vmatpush1.msra.mxu0 0.0
        %410 = vmatprep.subr.mxu0 0.0
        %411 = vmatpush1.msra.mxu0 0.0
        %412 = vmatprep.subr.mxu0 0.0
        %413 = vmatpush1.msra.mxu0 0.0
        %414 = vmatprep.subr.mxu0 0.0
        %415 = vmatpush1.msra.mxu0 0.0
        %416 = vmatprep.subr.mxu0 0.0
        %417 = vmatpush1.msra.mxu0 0.0
        %418 = vmatprep.subr.mxu0 0.0
        %419 = vmatpush1.msra.mxu0 0.0
        %420 = vmatprep.mubr.f32.mxu0 0.0
        %421 = vmatmul.mubr.f32.gmra.mrb[0].mxu0 %v309
        %v422 = vpop.f32.mrb[0].mxu0
        %v423 = vadd.f32 %v305, %v422
        %v424 = vpop.f32.mrb[0].mxu0
        %425 = vmatprep.mubr.f32.mxu0 0.0
        %426 = vmatmul.mubr.f32.gmra.mrb[0].mxu0 %v312
        %v427 = vpop.f32.mrb[0].mxu0
        %v428 = vadd.f32 %v305, %v427
        %v429 = vpop.f32.mrb[0].mxu0
        %430 = vmatprep.mubr.f32.mxu0 0.0
        %431 = vmatmul.mubr.f32.gmra.mrb[0].mxu0 %v315
        %v432 = vpop.f32.mrb[0].mxu0
        %v433 = vadd.f32 %v305, %v432
        %v434 = vpop.f32.mrb[0].mxu0
        %435 = vmatprep.mubr.f32.mxu0 0.0
        %436 = vmatmul.mubr.f32.gmra.mrb[0].mxu0 %v318
        %v437 = vpop.f32.mrb[0].mxu0
        %v438 = vadd.f32 %v305, %v437
        %v439 = vpop.f32.mrb[0].mxu0
        %440 = vmatprep.mubr.f32.mxu0 0.0
        %441 = vmatmul.mubr.f32.gmra.mrb[0].mxu0 %v321
        %v442 = vpop.f32.mrb[0].mxu0
        %v443 = vadd.f32 %v305, %v442
        %v444 = vpop.f32.mrb[0].mxu0
        %445 = vmatprep.mubr.f32.mxu0 0.0
        %446 = vmatmul.mubr.f32.gmra.mrb[0].mxu0 %v324
        %v447 = vpop.f32.mrb[0].mxu0
        %v448 = vadd.f32 %v305, %v447
        %v449 = vpop.f32.mrb[0].mxu0
        %450 = vmatprep.mubr.f32.mxu0 0.0
        %451 = vmatmul.mubr.f32.gmra.mrb[0].mxu0 %v327
        %v452 = vpop.f32.mrb[0].mxu0
        %v453 = vadd.f32 %v305, %v452
        %v454 = vpop.f32.mrb[0].mxu0
        %455 = vmatprep.mubr.f32.mxu0 0.0
        %456 = vmatmul.mubr.f32.gmra.mrb[0].mxu0 %v330
        %v457 = vpop.f32.mrb[0].mxu0
        %v458 = vadd.f32 %v305, %v457
        %v459 = vpop.f32.mrb[0].mxu0
        %460 = vmatprep.mubr.f32.mxu0 0.0
        %461 = vmatmul.mubr.f32.gmra.mrb[0].mxu0 %v333
        %v462 = vpop.f32.mrb[0].mxu0
        %v463 = vadd.f32 %v305, %v462
        %v464 = vpop.f32.mrb[0].mxu0
        %465 = vmatprep.mubr.f32.mxu0 0.0
        %466 = vmatmul.mubr.f32.gmra.mrb[0].mxu0 %v336
        %v467 = vpop.f32.mrb[0].mxu0
        %v468 = vadd.f32 %v305, %v467
        %v469 = vpop.f32.mrb[0].mxu0
        %470 = vmatprep.mubr.f32.mxu0 0.0
        %471 = vmatmul.mubr.f32.gmra.mrb[0].mxu0 %v339
        %v472 = vpop.f32.mrb[0].mxu0
        %v473 = vadd.f32 %v305, %v472
        %v474 = vpop.f32.mrb[0].mxu0
        %475 = vmatprep.mubr.f32.mxu0 0.0
        %476 = vmatmul.mubr.f32.gmra.mrb[0].mxu0 %v342
        %v477 = vpop.f32.mrb[0].mxu0
        %v478 = vadd.f32 %v305, %v477
        %v479 = vpop.f32.mrb[0].mxu0
        %480 = vmatprep.mubr.f32.mxu0 0.0
        %481 = vmatmul.mubr.f32.gmra.mrb[0].mxu0 %v345
        %v482 = vpop.f32.mrb[0].mxu0
        %v483 = vadd.f32 %v305, %v482
        %v484 = vpop.f32.mrb[0].mxu0
        %485 = vmatprep.mubr.f32.mxu0 0.0
        %486 = vmatmul.mubr.f32.gmra.mrb[0].mxu0 %v348
        %v487 = vpop.f32.mrb[0].mxu0
        %v488 = vadd.f32 %v305, %v487
        %v489 = vpop.f32.mrb[0].mxu0
        %490 = vmatprep.mubr.f32.mxu0 0.0
        %491 = vmatmul.mubr.f32.gmra.mrb[0].mxu0 %v351
        %v492 = vpop.f32.mrb[0].mxu0
        %v493 = vadd.f32 %v305, %v492
        %v494 = vpop.f32.mrb[0].mxu0
        %495 = vmatprep.mubr.f32.mxu0 0.0
        %496 = vmatmul.mubr.f32.gmra.mrb[0].mxu0 %v354
        %v497 = vpop.f32.mrb[0].mxu0
        %v498 = vadd.f32 %v305, %v497
        %v499 = vpop.f32.mrb[0].mxu0
        %500 = vdwg.mxu0
        %vm501 = vcmp.gt.f32.partialorder %v423, 0.0
        %vm502 = vcmp.gt.f32.partialorder %v428, 0.0
        %vm503 = vcmp.gt.f32.partialorder %v433, 0.0
        %vm504 = vcmp.gt.f32.partialorder %v438, 0.0
        %vm505 = vcmp.gt.f32.partialorder %v443, 0.0
        %vm506 = vcmp.gt.f32.partialorder %v448, 0.0
        %vm507 = vcmp.gt.f32.partialorder %v453, 0.0
        %vm508 = vcmp.gt.f32.partialorder %v458, 0.0
        %vm509 = vcmp.gt.f32.partialorder %v463, 0.0
        %vm510 = vcmp.gt.f32.partialorder %v468, 0.0
        %vm511 = vcmp.gt.f32.partialorder %v473, 0.0
        %vm512 = vcmp.gt.f32.partialorder %v478, 0.0
        %vm513 = vcmp.gt.f32.partialorder %v483, 0.0
        %vm514 = vcmp.gt.f32.partialorder %v488, 0.0
        %vm515 = vcmp.gt.f32.partialorder %v493, 0.0
        %vm516 = vcmp.gt.f32.partialorder %v498, 0.0
        %v517 = vmul.f32 %v423, 0.2
        %v518 = vmul.f32 %v428, 0.2
        %v519 = vmul.f32 %v433, 0.2
        %v520 = vmul.f32 %v438, 0.2
        %v521 = vmul.f32 %v443, 0.2
        %v522 = vmul.f32 %v448, 0.2
        %v523 = vmul.f32 %v453, 0.2
        %v524 = vmul.f32 %v458, 0.2
        %v525 = vmul.f32 %v463, 0.2
        %v526 = vmul.f32 %v468, 0.2
        %v527 = vmul.f32 %v473, 0.2
        %v528 = vmul.f32 %v478, 0.2
        %v529 = vmul.f32 %v483, 0.2
        %v530 = vmul.f32 %v488, 0.2
        %v531 = vmul.f32 %v493, 0.2
        %v532 = vmul.f32 %v498, 0.2
        %v533 = vsel %vm501, %v423, %v517
        %v534 = vsel %vm502, %v428, %v518
        %v535 = vsel %vm503, %v433, %v519
        %v536 = vsel %vm504, %v438, %v520
        %v537 = vsel %vm505, %v443, %v521
        %v538 = vsel %vm506, %v448, %v522
        %v539 = vsel %vm507, %v453, %v523
        %v540 = vsel %vm508, %v458, %v524
        %v541 = vsel %vm509, %v463, %v525
        %v542 = vsel %vm510, %v468, %v526
        %v543 = vsel %vm511, %v473, %v527
        %v544 = vsel %vm512, %v478, %v528
        %v545 = vsel %vm513, %v483, %v529
        %v546 = vsel %vm514, %v488, %v530
        %v547 = vsel %vm515, %v493, %v531
        %v548 = vsel %vm516, %v498, %v532
        %v549 = vld [vmem:[%s3] sm:$0xff]
        %v550 = vld [vmem:[%s3 + $0x8] sm:$0xff]
        %v551 = vld [vmem:[%s3 + $0x10] sm:$0xff]
        %v552 = vld [vmem:[%s3 + $0x18] sm:$0xff]
        %v553 = vld [vmem:[%s3 + $0x20] sm:$0xff]
        %v554 = vld [vmem:[%s3 + $0x28] sm:$0xff]
        %v555 = vld [vmem:[%s3 + $0x30] sm:$0xff]
        %v556 = vld [vmem:[%s3 + $0x38] sm:$0xff]
        %v557 = vld [vmem:[%s3 + $0x40] sm:$0xff]
        %v558 = vld [vmem:[%s3 + $0x48] sm:$0xff]
        %v559 = vld [vmem:[%s3 + $0x50] sm:$0xff]
        %v560 = vld [vmem:[%s3 + $0x58] sm:$0xff]
        %v561 = vld [vmem:[%s3 + $0x60] sm:$0xff]
        %v562 = vld [vmem:[%s3 + $0x68] sm:$0xff]
        %v563 = vld [vmem:[%s3 + $0x70] sm:$0xff]
        %v564 = vld [vmem:[%s3 + $0x78] sm:$0xff]
        %v565 = vld [vmem:[%s4] sm:$0x1]
        %v567 = vlaneseq
        %v568 = vshrl.u32 %v567, 7
        %v569 = vsub.s32 0, %v568
        %v570 = vrot.slane %v565, %v569
        %572 = vmatprep.subr.mxu0 0.0
        %573 = vmatpush1.msra.mxu0 %v549
        %574 = vmatprep.subr.mxu0 0.0
        %575 = vmatpush1.msra.mxu0 %v550
        %576 = vmatprep.subr.mxu0 0.0
        %577 = vmatpush1.msra.mxu0 %v551
        %578 = vmatprep.subr.mxu0 0.0
        %579 = vmatpush1.msra.mxu0 %v552
        %580 = vmatprep.subr.mxu0 0.0
        %581 = vmatpush1.msra.mxu0 %v553
        %582 = vmatprep.subr.mxu0 0.0
        %583 = vmatpush1.msra.mxu0 %v554
        %584 = vmatprep.subr.mxu0 0.0
        %585 = vmatpush1.msra.mxu0 %v555
        %586 = vmatprep.subr.mxu0 0.0
        %587 = vmatpush1.msra.mxu0 %v556
        %588 = vmatprep.subr.mxu0 0.0
        %589 = vmatpush1.msra.mxu0 %v557
        %590 = vmatprep.subr.mxu0 0.0
        %591 = vmatpush1.msra.mxu0 %v558
        %592 = vmatprep.subr.mxu0 0.0
        %593 = vmatpush1.msra.mxu0 %v559
        %594 = vmatprep.subr.mxu0 0.0
        %595 = vmatpush1.msra.mxu0 %v560
        %596 = vmatprep.subr.mxu0 0.0
        %597 = vmatpush1.msra.mxu0 %v561
        %598 = vmatprep.subr.mxu0 0.0
        %599 = vmatpush1.msra.mxu0 %v562
        %600 = vmatprep.subr.mxu0 0.0
        %601 = vmatpush1.msra.mxu0 %v563
        %602 = vmatprep.subr.mxu0 0.0
        %603 = vmatpush1.msra.mxu0 %v564
        %604 = vmatprep.subr.mxu0 0.0
        %605 = vmatpush1.msra.mxu0 0.0
        %606 = vmatprep.subr.mxu0 0.0
        %607 = vmatpush1.msra.mxu0 0.0
        %608 = vmatprep.subr.mxu0 0.0
        %609 = vmatpush1.msra.mxu0 0.0
        %610 = vmatprep.subr.mxu0 0.0
        %611 = vmatpush1.msra.mxu0 0.0
        %612 = vmatprep.subr.mxu0 0.0
        %613 = vmatpush1.msra.mxu0 0.0
        %614 = vmatprep.subr.mxu0 0.0
        %615 = vmatpush1.msra.mxu0 0.0
        %616 = vmatprep.subr.mxu0 0.0
        %617 = vmatpush1.msra.mxu0 0.0
        %618 = vmatprep.subr.mxu0 0.0
        %619 = vmatpush1.msra.mxu0 0.0
        %620 = vmatprep.subr.mxu0 0.0
        %621 = vmatpush1.msra.mxu0 0.0
        %622 = vmatprep.subr.mxu0 0.0
        %623 = vmatpush1.msra.mxu0 0.0
        %624 = vmatprep.subr.mxu0 0.0
        %625 = vmatpush1.msra.mxu0 0.0
        %626 = vmatprep.subr.mxu0 0.0
        %627 = vmatpush1.msra.mxu0 0.0
        %628 = vmatprep.subr.mxu0 0.0
        %629 = vmatpush1.msra.mxu0 0.0
        %630 = vmatprep.subr.mxu0 0.0
        %631 = vmatpush1.msra.mxu0 0.0
        %632 = vmatprep.subr.mxu0 0.0
        %633 = vmatpush1.msra.mxu0 0.0
        %634 = vmatprep.subr.mxu0 0.0
        %635 = vmatpush1.msra.mxu0 0.0
        %636 = vmatprep.mubr.f32.mxu0 0.0
        %637 = vmatmul.mubr.f32.gmra.mrb[0].mxu0 %v533
        %v638 = vpop.f32.mrb[0].mxu0
        %v639 = vadd.f32 %v570, %v638
        %v640 = vpop.f32.mrb[0].mxu0
        %641 = vmatprep.mubr.f32.mxu0 0.0
        %642 = vmatmul.mubr.f32.gmra.mrb[0].mxu0 %v534
        %v643 = vpop.f32.mrb[0].mxu0
        %v644 = vadd.f32 %v570, %v643
        %v645 = vpop.f32.mrb[0].mxu0
        %646 = vmatprep.mubr.f32.mxu0 0.0
        %647 = vmatmul.mubr.f32.gmra.mrb[0].mxu0 %v535
        %v648 = vpop.f32.mrb[0].mxu0
        %v649 = vadd.f32 %v570, %v648
        %v650 = vpop.f32.mrb[0].mxu0
        %651 = vmatprep.mubr.f32.mxu0 0.0
        %652 = vmatmul.mubr.f32.gmra.mrb[0].mxu0 %v536
        %v653 = vpop.f32.mrb[0].mxu0
        %v654 = vadd.f32 %v570, %v653
        %v655 = vpop.f32.mrb[0].mxu0
        %656 = vmatprep.mubr.f32.mxu0 0.0
        %657 = vmatmul.mubr.f32.gmra.mrb[0].mxu0 %v537
        %v658 = vpop.f32.mrb[0].mxu0
        %v659 = vadd.f32 %v570, %v658
        %v660 = vpop.f32.mrb[0].mxu0
        %661 = vmatprep.mubr.f32.mxu0 0.0
        %662 = vmatmul.mubr.f32.gmra.mrb[0].mxu0 %v538
        %v663 = vpop.f32.mrb[0].mxu0
        %v664 = vadd.f32 %v570, %v663
        %v665 = vpop.f32.mrb[0].mxu0
        %666 = vmatprep.mubr.f32.mxu0 0.0
        %667 = vmatmul.mubr.f32.gmra.mrb[0].mxu0 %v539
        %v668 = vpop.f32.mrb[0].mxu0
        %v669 = vadd.f32 %v570, %v668
        %v670 = vpop.f32.mrb[0].mxu0
        %671 = vmatprep.mubr.f32.mxu0 0.0
        %672 = vmatmul.mubr.f32.gmra.mrb[0].mxu0 %v540
        %v673 = vpop.f32.mrb[0].mxu0
        %v674 = vadd.f32 %v570, %v673
        %v675 = vpop.f32.mrb[0].mxu0
        %676 = vmatprep.mubr.f32.mxu0 0.0
        %677 = vmatmul.mubr.f32.gmra.mrb[0].mxu0 %v541
        %v678 = vpop.f32.mrb[0].mxu0
        %v679 = vadd.f32 %v570, %v678
        %v680 = vpop.f32.mrb[0].mxu0
        %681 = vmatprep.mubr.f32.mxu0 0.0
        %682 = vmatmul.mubr.f32.gmra.mrb[0].mxu0 %v542
        %v683 = vpop.f32.mrb[0].mxu0
        %v684 = vadd.f32 %v570, %v683
        %v685 = vpop.f32.mrb[0].mxu0
        %686 = vmatprep.mubr.f32.mxu0 0.0
        %687 = vmatmul.mubr.f32.gmra.mrb[0].mxu0 %v543
        %v688 = vpop.f32.mrb[0].mxu0
        %v689 = vadd.f32 %v570, %v688
        %v690 = vpop.f32.mrb[0].mxu0
        %691 = vmatprep.mubr.f32.mxu0 0.0
        %692 = vmatmul.mubr.f32.gmra.mrb[0].mxu0 %v544
        %v693 = vpop.f32.mrb[0].mxu0
        %v694 = vadd.f32 %v570, %v693
        %v695 = vpop.f32.mrb[0].mxu0
        %696 = vmatprep.mubr.f32.mxu0 0.0
        %697 = vmatmul.mubr.f32.gmra.mrb[0].mxu0 %v545
        %v698 = vpop.f32.mrb[0].mxu0
        %v699 = vadd.f32 %v570, %v698
        %v700 = vpop.f32.mrb[0].mxu0
        %701 = vmatprep.mubr.f32.mxu0 0.0
        %702 = vmatmul.mubr.f32.gmra.mrb[0].mxu0 %v546
        %v703 = vpop.f32.mrb[0].mxu0
        %v704 = vadd.f32 %v570, %v703
        %v705 = vpop.f32.mrb[0].mxu0
        %706 = vmatprep.mubr.f32.mxu0 0.0
        %707 = vmatmul.mubr.f32.gmra.mrb[0].mxu0 %v547
        %v708 = vpop.f32.mrb[0].mxu0
        %v709 = vadd.f32 %v570, %v708
        %v710 = vpop.f32.mrb[0].mxu0
        %711 = vmatprep.mubr.f32.mxu0 0.0
        %712 = vmatmul.mubr.f32.gmra.mrb[0].mxu0 %v548
        %v713 = vpop.f32.mrb[0].mxu0
        %v714 = vadd.f32 %v570, %v713
        %v715 = vpop.f32.mrb[0].mxu0
        %716 = vdwg.mxu0
        %vm717 = vcmp.gt.f32.partialorder %v639, 0.0
        %vm718 = vcmp.gt.f32.partialorder %v644, 0.0
        %vm719 = vcmp.gt.f32.partialorder %v649, 0.0
        %vm720 = vcmp.gt.f32.partialorder %v654, 0.0
        %vm721 = vcmp.gt.f32.partialorder %v659, 0.0
        %vm722 = vcmp.gt.f32.partialorder %v664, 0.0
        %vm723 = vcmp.gt.f32.partialorder %v669, 0.0
        %vm724 = vcmp.gt.f32.partialorder %v674, 0.0
        %vm725 = vcmp.gt.f32.partialorder %v679, 0.0
        %vm726 = vcmp.gt.f32.partialorder %v684, 0.0
        %vm727 = vcmp.gt.f32.partialorder %v689, 0.0
        %vm728 = vcmp.gt.f32.partialorder %v694, 0.0
        %vm729 = vcmp.gt.f32.partialorder %v699, 0.0
        %vm730 = vcmp.gt.f32.partialorder %v704, 0.0
        %vm731 = vcmp.gt.f32.partialorder %v709, 0.0
        %vm732 = vcmp.gt.f32.partialorder %v714, 0.0
        %v733 = vmul.f32 %v639, 0.2
        %v734 = vmul.f32 %v644, 0.2
        %v735 = vmul.f32 %v649, 0.2
        %v736 = vmul.f32 %v654, 0.2
        %v737 = vmul.f32 %v659, 0.2
        %v738 = vmul.f32 %v664, 0.2
        %v739 = vmul.f32 %v669, 0.2
        %v740 = vmul.f32 %v674, 0.2
        %v741 = vmul.f32 %v679, 0.2
        %v742 = vmul.f32 %v684, 0.2
        %v743 = vmul.f32 %v689, 0.2
        %v744 = vmul.f32 %v694, 0.2
        %v745 = vmul.f32 %v699, 0.2
        %v746 = vmul.f32 %v704, 0.2
        %v747 = vmul.f32 %v709, 0.2
        %v748 = vmul.f32 %v714, 0.2
        %v749 = vsel %vm717, %v639, %v733
        %v750 = vsel %vm718, %v644, %v734
        %v751 = vsel %vm719, %v649, %v735
        %v752 = vsel %vm720, %v654, %v736
        %v753 = vsel %vm721, %v659, %v737
        %v754 = vsel %vm722, %v664, %v738
        %v755 = vsel %vm723, %v669, %v739
        %v756 = vsel %vm724, %v674, %v740
        %v757 = vsel %vm725, %v679, %v741
        %v758 = vsel %vm726, %v684, %v742
        %v759 = vsel %vm727, %v689, %v743
        %v760 = vsel %vm728, %v694, %v744
        %v761 = vsel %vm729, %v699, %v745
        %v762 = vsel %vm730, %v704, %v746
        %v763 = vsel %vm731, %v709, %v747
        %v764 = vsel %vm732, %v714, %v748
        %v765 = vld [vmem:[%s5] sm:$0x1]
        %v767 = vlaneseq
        %v768 = vshrl.u32 %v767, 7
        %v769 = vsub.s32 0, %v768
        %v770 = vrot.slane %v765, %v769
        %v772 = vmul.f32 %v749, %v770
        %v773 = vmul.f32 %v750, %v770
        %v774 = vmul.f32 %v751, %v770
        %v775 = vmul.f32 %v752, %v770
        %v776 = vmul.f32 %v753, %v770
        %v777 = vmul.f32 %v754, %v770
        %v778 = vmul.f32 %v755, %v770
        %v779 = vmul.f32 %v756, %v770
        %v780 = vmul.f32 %v757, %v770
        %v781 = vmul.f32 %v758, %v770
        %v782 = vmul.f32 %v759, %v770
        %v783 = vmul.f32 %v760, %v770
        %v784 = vmul.f32 %v761, %v770
        %v785 = vmul.f32 %v762, %v770
        %v786 = vmul.f32 %v763, %v770
        %v787 = vmul.f32 %v764, %v770
        %vm788 = vcmask 523264
        %v789 = vsel %vm788, %v772, 0.0
        %790 = vadd.xlane.f32.xlu0 %v789
        %v791 = vpop.xlane.xlu0 %790
        %v792 = vsel %vm788, %v773, 0.0
        %793 = vadd.xlane.f32.xlu0 %v792
        %v794 = vpop.xlane.xlu0 %793
        %v795 = vsel %vm788, %v774, 0.0
        %796 = vadd.xlane.f32.xlu0 %v795
        %v797 = vpop.xlane.xlu0 %796
        %v798 = vsel %vm788, %v775, 0.0
        %799 = vadd.xlane.f32.xlu0 %v798
        %v800 = vpop.xlane.xlu0 %799
        %v801 = vsel %vm788, %v776, 0.0
        %802 = vadd.xlane.f32.xlu0 %v801
        %v803 = vpop.xlane.xlu0 %802
        %v804 = vsel %vm788, %v777, 0.0
        %805 = vadd.xlane.f32.xlu0 %v804
        %v806 = vpop.xlane.xlu0 %805
        %v807 = vsel %vm788, %v778, 0.0
        %808 = vadd.xlane.f32.xlu0 %v807
        %v809 = vpop.xlane.xlu0 %808
        %v810 = vsel %vm788, %v779, 0.0
        %811 = vadd.xlane.f32.xlu0 %v810
        %v812 = vpop.xlane.xlu0 %811
        %v813 = vsel %vm788, %v780, 0.0
        %814 = vadd.xlane.f32.xlu0 %v813
        %v815 = vpop.xlane.xlu0 %814
        %v816 = vsel %vm788, %v781, 0.0
        %817 = vadd.xlane.f32.xlu0 %v816
        %v818 = vpop.xlane.xlu0 %817
        %v819 = vsel %vm788, %v782, 0.0
        %820 = vadd.xlane.f32.xlu0 %v819
        %v821 = vpop.xlane.xlu0 %820
        %v822 = vsel %vm788, %v783, 0.0
        %823 = vadd.xlane.f32.xlu0 %v822
        %v824 = vpop.xlane.xlu0 %823
        %v825 = vsel %vm788, %v784, 0.0
        %826 = vadd.xlane.f32.xlu0 %v825
        %v827 = vpop.xlane.xlu0 %826
        %v828 = vsel %vm788, %v785, 0.0
        %829 = vadd.xlane.f32.xlu0 %v828
        %v830 = vpop.xlane.xlu0 %829
        %v831 = vsel %vm788, %v786, 0.0
        %832 = vadd.xlane.f32.xlu0 %v831
        %v833 = vpop.xlane.xlu0 %832
        %v834 = vsel %vm788, %v787, 0.0
        %835 = vadd.xlane.f32.xlu0 %v834
        %v836 = vpop.xlane.xlu0 %835
        %v837 = vld [vmem:[#allocation2] sm:$0x1]
        %v839 = vlaneseq
        %v840 = vshrl.u32 %v839, 7
        %v841 = vsub.s32 0, %v840
        %v842 = vrot.slane %v837, %v841
        %v844 = vadd.f32 %v791, %v842
        %v845 = vadd.f32 %v794, %v842
        %v846 = vadd.f32 %v797, %v842
        %v847 = vadd.f32 %v800, %v842
        %v848 = vadd.f32 %v803, %v842
        %v849 = vadd.f32 %v806, %v842
        %v850 = vadd.f32 %v809, %v842
        %v851 = vadd.f32 %v812, %v842
        %v852 = vadd.f32 %v815, %v842
        %v853 = vadd.f32 %v818, %v842
        %v854 = vadd.f32 %v821, %v842
        %v855 = vadd.f32 %v824, %v842
        %v856 = vadd.f32 %v827, %v842
        %v857 = vadd.f32 %v830, %v842
        %v858 = vadd.f32 %v833, %v842
        %v859 = vadd.f32 %v836, %v842
        %v860 = vxor.u32 %v844, 2147483648
        %v861 = vxor.u32 %v845, 2147483648
        %v862 = vxor.u32 %v846, 2147483648
        %v863 = vxor.u32 %v847, 2147483648
        %v864 = vxor.u32 %v848, 2147483648
        %v865 = vxor.u32 %v849, 2147483648
        %v866 = vxor.u32 %v850, 2147483648
        %v867 = vxor.u32 %v851, 2147483648
        %v868 = vxor.u32 %v852, 2147483648
        %v869 = vxor.u32 %v853, 2147483648
        %v870 = vxor.u32 %v854, 2147483648
        %v871 = vxor.u32 %v855, 2147483648
        %v872 = vxor.u32 %v856, 2147483648
        %v873 = vxor.u32 %v857, 2147483648
        %v874 = vxor.u32 %v858, 2147483648
        %v875 = vxor.u32 %v859, 2147483648
        %v876 = vmul.f32 %v860, 1.442695
        %v877 = vpow.pop %v876
        %v878 = vmul.f32 %v861, 1.442695
        %v879 = vpow.pop %v878
        %v880 = vmul.f32 %v862, 1.442695
        %v881 = vpow.pop %v880
        %v882 = vmul.f32 %v863, 1.442695
        %v883 = vpow.pop %v882
        %v884 = vmul.f32 %v864, 1.442695
        %v885 = vpow.pop %v884
        %v886 = vmul.f32 %v865, 1.442695
        %v887 = vpow.pop %v886
        %v888 = vmul.f32 %v866, 1.442695
        %v889 = vpow.pop %v888
        %v890 = vmul.f32 %v867, 1.442695
        %v891 = vpow.pop %v890
        %v892 = vmul.f32 %v868, 1.442695
        %v893 = vpow.pop %v892
        %v894 = vmul.f32 %v869, 1.442695
        %v895 = vpow.pop %v894
        %v896 = vmul.f32 %v870, 1.442695
        %v897 = vpow.pop %v896
        %v898 = vmul.f32 %v871, 1.442695
        %v899 = vpow.pop %v898
        %v900 = vmul.f32 %v872, 1.442695
        %v901 = vpow.pop %v900
        %v902 = vmul.f32 %v873, 1.442695
        %v903 = vpow.pop %v902
        %v904 = vmul.f32 %v874, 1.442695
        %v905 = vpow.pop %v904
        %v906 = vmul.f32 %v875, 1.442695
        %v907 = vpow.pop %v906
        %v908 = vadd.f32 %v877, 1.0
        %v909 = vadd.f32 %v879, 1.0
        %v910 = vadd.f32 %v881, 1.0
        %v911 = vadd.f32 %v883, 1.0
        %v912 = vadd.f32 %v885, 1.0
        %v913 = vadd.f32 %v887, 1.0
        %v914 = vadd.f32 %v889, 1.0
        %v915 = vadd.f32 %v891, 1.0
        %v916 = vadd.f32 %v893, 1.0
        %v917 = vadd.f32 %v895, 1.0
        %v918 = vadd.f32 %v897, 1.0
        %v919 = vadd.f32 %v899, 1.0
        %v920 = vadd.f32 %v901, 1.0
        %v921 = vadd.f32 %v903, 1.0
        %v922 = vadd.f32 %v905, 1.0
        %v923 = vadd.f32 %v907, 1.0
        %v924 = vrcp.pop %v908
        %v925 = vmul.f32 1.0, %v924
        %v926 = vrcp.pop %v909
        %v927 = vmul.f32 1.0, %v926
        %v928 = vrcp.pop %v910
        %v929 = vmul.f32 1.0, %v928
        %v930 = vrcp.pop %v911
        %v931 = vmul.f32 1.0, %v930
        %v932 = vrcp.pop %v912
        %v933 = vmul.f32 1.0, %v932
        %v934 = vrcp.pop %v913
        %v935 = vmul.f32 1.0, %v934
        %v936 = vrcp.pop %v914
        %v937 = vmul.f32 1.0, %v936
        %v938 = vrcp.pop %v915
        %v939 = vmul.f32 1.0, %v938
        %v940 = vrcp.pop %v916
        %v941 = vmul.f32 1.0, %v940
        %v942 = vrcp.pop %v917
        %v943 = vmul.f32 1.0, %v942
        %v944 = vrcp.pop %v918
        %v945 = vmul.f32 1.0, %v944
        %v946 = vrcp.pop %v919
        %v947 = vmul.f32 1.0, %v946
        %v948 = vrcp.pop %v920
        %v949 = vmul.f32 1.0, %v948
        %v950 = vrcp.pop %v921
        %v951 = vmul.f32 1.0, %v950
        %v952 = vrcp.pop %v922
        %v953 = vmul.f32 1.0, %v952
        %v954 = vrcp.pop %v923
        %v955 = vmul.f32 1.0, %v954
        %956 = vxpose.xlu0.b32.start [1/16] %v925, 128
        %957 = vxpose.xlu0.b32.cont [2/16] %v927, 128
        %958 = vxpose.xlu0.b32.cont [3/16] %v929, 128
        %959 = vxpose.xlu0.b32.cont [4/16] %v931, 128
        %960 = vxpose.xlu0.b32.cont [5/16] %v933, 128
        %961 = vxpose.xlu0.b32.cont [6/16] %v935, 128
        %962 = vxpose.xlu0.b32.cont [7/16] %v937, 128
        %963 = vxpose.xlu0.b32.cont [8/16] %v939, 128
        %964 = vxpose.xlu0.b32.cont [9/16] %v941, 128
        %965 = vxpose.xlu0.b32.cont [10/16] %v943, 128
        %966 = vxpose.xlu0.b32.cont [11/16] %v945, 128
        %967 = vxpose.xlu0.b32.cont [12/16] %v947, 128
        %968 = vxpose.xlu0.b32.cont [13/16] %v949, 128
        %969 = vxpose.xlu0.b32.cont [14/16] %v951, 128
        %970 = vxpose.xlu0.b32.cont [15/16] %v953, 128
        %971 = vxpose.xlu0.b32.end [16/16] %v955, 128
        %v972 = vpop.trf.xlu0
        %v973 = vpop.trf.xlu0
        %v974 = vpop.trf.xlu0
        %v975 = vpop.trf.xlu0
        %v976 = vpop.trf.xlu0
        %v977 = vpop.trf.xlu0
        %v978 = vpop.trf.xlu0
        %v979 = vpop.trf.xlu0
        %v980 = vpop.trf.xlu0
        %v981 = vpop.trf.xlu0
        %v982 = vpop.trf.xlu0
        %v983 = vpop.trf.xlu0
        %v984 = vpop.trf.xlu0
        %v985 = vpop.trf.xlu0
        %v986 = vpop.trf.xlu0
        %v987 = vpop.trf.xlu0
        %988 = vst [vmem:[%s273] sm:$0x1] %v972
        %s989 = sand.u32 %s183, 1
        %s990 = scalar_lea.sflag [#allocation4], %s989
        %s991 = sand.u32 %s183, 1
        %s992 = scalar_lea.vmem [#allocation3], %s991
        // Predicated region
        $region49: #{tpu_custom_call.1} parent=47 // pred_check
          %p993 = pneg %p193
        $region50: #{tpu_custom_call.1} parent=47 // pred_check_branch
          %995 = sbr.rel (%p993) target = $region52
        $region51: #{tpu_custom_call.1} parent=47 // pred_region
          %s997 = ssub.s32 16, 16
          %998 = vsyncadd %s990, %s997
          %s999 = smul.addr %s23, 16
          %s1000 = scalar_lea.hbm %s7, %s999
          %s1002 = sshll.u32 %s992, 4
          %s1003 = int_to_ptr.vmem [resolvable:$true] %s1002
          %1005 = dma.vmem_to_hbm [thread:$0]  %s1003, 16, %s1000, %s990
        $region52: #{tpu_custom_call.1} parent=47 // pred_fallthru
          _
      $region48: #{tpu_custom_call.1} parent=5 // pred_fallthru
        _
      %p1006 = scmp.le.s32.totalorder 2, %s18
      // Predicated region
      $region53: #{tpu_custom_call.1} parent=5 // pred_check
        %p1007 = pneg %p1006
      $region54: #{tpu_custom_call.1} parent=5 // pred_check_branch
        %1009 = sbr.rel (%p1007) target = $region56
      $region55: #{tpu_custom_call.1} parent=5 // pred_region
        %s1010 = ssub.s32 %s18, 2
        // Predicated region
        $region57: #{tpu_custom_call.1} parent=55 // pred_check
          %p1011 = pneg %p199
        $region58: #{tpu_custom_call.1} parent=55 // pred_check_branch
          %1013 = sbr.rel (%p1011) target = $region60
        $region59: #{tpu_custom_call.1} parent=55 // pred_region
          %s1014 = sand.u32 %s184, 1
          %s1015 = scalar_lea.sflag [#allocation4], %s1014
          %s1016 = sand.u32 %s184, 1
          %s1017 = scalar_lea.vmem [#allocation3], %s1016
          %1018 = dma.done %s1015, 16
        $region60: #{tpu_custom_call.1} parent=55 // pred_fallthru
          _
      $region56: #{tpu_custom_call.1} parent=5 // pred_fallthru
        _
    $region6: #{tpu_custom_call.1} parent=1 // loop_footer
      %s22 = sadd.s32 1, %s18
    $region7: #{tpu_custom_call.1} parent=1 // loop_footer_branch
      %17 = sbr.rel target = $region3
    $region8: #{tpu_custom_call.1} parent=1 // loop_exit
      _
    %1019 = vsyncpa [#allocation4], 1
    %s1020 = scalar_lea.sflag [#allocation4], 1
    %1021 = vsyncpa %s1020, 1

</llo_original>
